<compile_context>
chip_gen: v6e
topology: v6e:2x2x1
jax: 0.10.0
libtpu: 0.0.40
codegen_flags: <defaults>
</compile_context>

<pallas_src>
import jax
import jax.numpy as jnp
from jax.experimental import pallas as pl
from jax.experimental.pallas import tpu as pltpu

_LANE = 128
_SUBLANE = 8


def _round_up(n, m):
    return ((n + m - 1) // m) * m


def _mlp_kernel(x_ref, w1_ref, b1_ref, w2_ref, b2_ref, o_ref):
    # fc1: (TB, D) @ (D, H) + (1, H)  -- MXU matmul, f32 accumulation.
    h = jnp.dot(x_ref[...], w1_ref[...], preferred_element_type=jnp.float32)
    h = h + b1_ref[...]
    # Sigmoid: exp / reciprocal ride the EUP slot (cheap under the DMA-bound regime).
    h = jax.nn.sigmoid(h)
    # fc2: (TB, H) @ (H, 1) + (1, 1).
    out = jnp.dot(h, w2_ref[...], preferred_element_type=jnp.float32)
    out = out + b2_ref[...]
    # Lane-dense store: relayout the (TB, 1) column to a (1, TB) row so the output
    # block is written with unmasked stores and a contiguous writeback DMA.
    o_ref[...] = out.reshape(1, -1).astype(o_ref.dtype)


def _choose_batch_tile(B, D):
    """Per-grid-step batch tile: sized by HBM bytes, capped by VMEM, megacore-aware."""
    # ~2 MiB of raw x HBM traffic per step (amortizes per-step overhead).
    tb_bytes = (2 * 1024 * 1024) // max(D * 4, 1)
    # Keep the lane-padded x tile <= 4 MiB per buffer (it is double-buffered), so the
    # schedule fits v7x's 64 MiB VMEM and v5e/v6e scoped limits with headroom.
    d_padded = _round_up(D, _LANE)
    tb_vmem = (4 * 1024 * 1024) // (d_padded * 4)
    tb = min(tb_bytes, tb_vmem)
    if tb >= _LANE:
        tb = (tb // _LANE) * _LANE          # multiple of 128 -> lane-dense output
    else:
        tb = max(_SUBLANE, (tb // _SUBLANE) * _SUBLANE)
    # Ensure >=2 grid steps when the batch allows it, so ("parallel",) semantics can
    # split tiles across v7x's two TensorCores (no-op on single-TC v5e/v6e).
    tb = min(tb, _round_up((B + 1) // 2, _LANE))
    if tb >= B:
        tb = B                               # single full-extent block (legal for any B)
    return tb


def simple_nn_forward(x, w1, b1, w2, b2):
    """Fused forward pass of SimpleNN.

    x:  (B, D) float32
    w1: (D, 10), b1: (10,), w2: (10, 1), b2: (1,)
    returns (B, 1) float32 logits (matches PyTorch fc2(sigmoid(fc1(x)))).
    """
    B, D = x.shape
    H = w1.shape[1]

    tb = _choose_batch_tile(B, D)
    num_tiles = -(-B // tb)                  # cdiv; last block may be ragged

    # Biases as 2-D so they broadcast cleanly inside the kernel.
    b1_2d = b1.reshape(1, H)
    b2_2d = b2.reshape(1, 1)

    # Advisory cost: this call is memory-bound on the x stream.
    cost = pl.CostEstimate(
        flops=2 * B * D * H + 2 * B * H,
        transcendentals=B * H,
        bytes_accessed=4 * (B * D + B + D * H + H + H + 1),
    )

    out_rows = pl.pallas_call(
        _mlp_kernel,
        out_shape=jax.ShapeDtypeStruct((num_tiles, tb), jnp.float32),
        grid_spec=pltpu.PrefetchScalarGridSpec(
            num_scalar_prefetch=0,
            grid=(num_tiles,),
            in_specs=[
                # x streams one (tb, D) tile per grid step (auto double-buffered);
                # the ragged final tile reads OOB rows whose outputs are discarded.
                pl.BlockSpec((tb, D), lambda i: (i, 0)),
                # Weights / biases: constant index_map -> resident in VMEM.
                pl.BlockSpec((D, H), lambda i: (0, 0)),
                pl.BlockSpec((1, H), lambda i: (0, 0)),
                pl.BlockSpec((H, 1), lambda i: (0, 0)),
                pl.BlockSpec((1, 1), lambda i: (0, 0)),
            ],
            # Lane-dense output: one (1, tb) row per tile.
            out_specs=pl.BlockSpec((1, tb), lambda i: (i, 0)),
        ),
        compiler_params=pltpu.CompilerParams(
            dimension_semantics=("parallel",),
            vmem_limit_bytes=48 * 1024 * 1024,
        ),
        cost_estimate=cost,
    )(x, w1, b1_2d, w2, b2_2d)

    # (num_tiles, tb) is batch order row-major; drop the ragged tail, back to (B, 1).
    return out_rows.reshape(num_tiles * tb)[:B].reshape(B, 1)


if __name__ == "__main__":
    key = jax.random.PRNGKey(0)
    k_x, k_w1, k_b1, k_w2, k_b2, k_x2 = jax.random.split(key, 6)

    batch, input_size, hidden = 8, 32, 10

    # Deterministic parameter init (PyTorch-style uniform bounds, synthetic weights).
    bound1 = 1.0 / (input_size ** 0.5)
    bound2 = 1.0 / (hidden ** 0.5)
    w1 = jax.random.uniform(k_w1, (input_size, hidden), jnp.float32, -bound1, bound1)
    b1 = jax.random.uniform(k_b1, (hidden,), jnp.float32, -bound1, bound1)
    w2 = jax.random.uniform(k_w2, (hidden, 1), jnp.float32, -bound2, bound2)
    b2 = jax.random.uniform(k_b2, (1,), jnp.float32, -bound2, bound2)

    # --- small case (single full-extent tile) ---
    x = jax.random.normal(k_x, (batch, input_size), jnp.float32)
    out = jax.block_until_ready(simple_nn_forward(x, w1, b1, w2, b2))
    ref = jax.nn.sigmoid(x @ w1 + b1) @ w2 + b2
    assert out.shape == (batch, 1)
    assert jnp.allclose(out, ref, atol=1e-5, rtol=1e-5)

    # --- multi-tile case with ragged tail (exercises cdiv grid + OOB edge block) ---
    batch2 = 1037
    x2 = jax.random.normal(k_x2, (batch2, input_size), jnp.float32)
    out2 = jax.block_until_ready(simple_nn_forward(x2, w1, b1, w2, b2))
    ref2 = jax.nn.sigmoid(x2 @ w1 + b1) @ w2 + b2
    assert out2.shape == (batch2, 1)
    assert jnp.allclose(out2, ref2, atol=1e-5, rtol=1e-5)

    print("KERNEL_OK")
</pallas_src>

<mosaic_0001>
module attributes {stable_mosaic.version = 11 : i64} {
  func.func @_mlp_kernel(%arg0: i32, %arg1: memref<8x32xf32, #tpu.memory_space<vmem>>, %arg2: memref<32x10xf32, #tpu.memory_space<vmem>>, %arg3: memref<1x10xf32, #tpu.memory_space<vmem>>, %arg4: memref<10x1xf32, #tpu.memory_space<vmem>>, %arg5: memref<1x1xf32, #tpu.memory_space<vmem>>, %arg6: memref<1x8xf32, #tpu.memory_space<vmem>>) attributes {dimension_semantics = [#tpu.dimension_semantics<parallel>], iteration_bounds = array<i64: 1>, scalar_prefetch = 0 : i64, scratch_operands = 0 : i64, tpu.core_type = #tpu.core_type<tc>, window_params = [{transform_indices = @transform_0, window_bounds = array<i64: 8, 32>}, {pipeline_mode = #tpu.pipeline_mode<synchronous>, transform_indices = @transform_1, window_bounds = array<i64: 32, 10>}, {pipeline_mode = #tpu.pipeline_mode<synchronous>, transform_indices = @transform_2, window_bounds = array<i64: 1, 10>}, {pipeline_mode = #tpu.pipeline_mode<synchronous>, transform_indices = @transform_3, window_bounds = array<i64: 10, 1>}, {pipeline_mode = #tpu.pipeline_mode<synchronous>, transform_indices = @transform_4, window_bounds = array<i64: 1, 1>}, {transform_indices = @transform_5, window_bounds = array<i64: 1, 8>}]} {
    %c0 = arith.constant 0 : index
    %c0_0 = arith.constant 0 : index
    %0 = vector.load %arg1[%c0, %c0_0] : memref<8x32xf32, #tpu.memory_space<vmem>>, vector<8x32xf32>
    %c0_1 = arith.constant 0 : index
    %c0_2 = arith.constant 0 : index
    %1 = vector.load %arg2[%c0_1, %c0_2] : memref<32x10xf32, #tpu.memory_space<vmem>>, vector<32x10xf32>
    %cst = arith.constant dense<0.000000e+00> : vector<8x10xf32>
    %2 = tpu.matmul %0, %1, %cst {dimension_numbers = #tpu.dot_dimension_numbers<[1], [0], [0], [1], [0, 0, 1, 1], [], []>} : vector<8x32xf32>, vector<32x10xf32>, vector<8x10xf32> -> vector<8x10xf32>
    %c0_3 = arith.constant 0 : index
    %c0_4 = arith.constant 0 : index
    %3 = vector.load %arg3[%c0_3, %c0_4] : memref<1x10xf32, #tpu.memory_space<vmem>>, vector<1x10xf32>
    %4 = vector.broadcast %3 : vector<1x10xf32> to vector<8x10xf32>
    %5 = arith.addf %2, %4 : vector<8x10xf32>
    %6 = arith.negf %5 : vector<8x10xf32>
    %7 = math.exp %6 : vector<8x10xf32>
    %cst_5 = arith.constant 1.000000e+00 : f32
    %8 = vector.broadcast %cst_5 : f32 to vector<8x10xf32>
    %9 = arith.addf %8, %7 : vector<8x10xf32>
    %10 = arith.divf %8, %9 : vector<8x10xf32>
    %c0_6 = arith.constant 0 : index
    %c0_7 = arith.constant 0 : index
    %11 = vector.load %arg4[%c0_6, %c0_7] : memref<10x1xf32, #tpu.memory_space<vmem>>, vector<10x1xf32>
    %cst_8 = arith.constant dense<0.000000e+00> : vector<8x1xf32>
    %12 = tpu.matmul %10, %11, %cst_8 {dimension_numbers = #tpu.dot_dimension_numbers<[1], [0], [0], [1], [0, 0, 1, 1], [], []>} : vector<8x10xf32>, vector<10x1xf32>, vector<8x1xf32> -> vector<8x1xf32>
    %c0_9 = arith.constant 0 : index
    %c0_10 = arith.constant 0 : index
    %13 = vector.load %arg5[%c0_9, %c0_10] : memref<1x1xf32, #tpu.memory_space<vmem>>, vector<1x1xf32>
    %14 = vector.broadcast %13 : vector<1x1xf32> to vector<8x1xf32>
    %15 = arith.addf %12, %14 : vector<8x1xf32>
    %16 = vector.shape_cast %15 : vector<8x1xf32> to vector<1x8xf32>
    %c0_11 = arith.constant 0 : index
    %c0_12 = arith.constant 0 : index
    %17 = vector.load %arg6[%c0_11, %c0_12] : memref<1x8xf32, #tpu.memory_space<vmem>>, vector<1x8xf32>
    tpu.vector_store %arg6[%c0_11, %c0_12], %16 {strides = array<i32>} : memref<1x8xf32, #tpu.memory_space<vmem>>, vector<1x8xf32>,
    return
  }
  func.func @transform_0(%arg0: i32) -> (i32, i32) {
    %c0_i32 = arith.constant 0 : i32
    %c0_i32_0 = arith.constant 0 : i32
    return %arg0, %c0_i32 : i32, i32
  }
  func.func @transform_1(%arg0: i32) -> (i32, i32) {
    %c0_i32 = arith.constant 0 : i32
    %c0_i32_0 = arith.constant 0 : i32
    %c0_i32_1 = arith.constant 0 : i32
    return %c0_i32, %c0_i32_0 : i32, i32
  }
  func.func @transform_2(%arg0: i32) -> (i32, i32) {
    %c0_i32 = arith.constant 0 : i32
    %c0_i32_0 = arith.constant 0 : i32
    %c0_i32_1 = arith.constant 0 : i32
    return %c0_i32, %c0_i32_0 : i32, i32
  }
  func.func @transform_3(%arg0: i32) -> (i32, i32) {
    %c0_i32 = arith.constant 0 : i32
    %c0_i32_0 = arith.constant 0 : i32
    %c0_i32_1 = arith.constant 0 : i32
    return %c0_i32, %c0_i32_0 : i32, i32
  }
  func.func @transform_4(%arg0: i32) -> (i32, i32) {
    %c0_i32 = arith.constant 0 : i32
    %c0_i32_0 = arith.constant 0 : i32
    %c0_i32_1 = arith.constant 0 : i32
    return %c0_i32, %c0_i32_0 : i32, i32
  }
  func.func @transform_5(%arg0: i32) -> (i32, i32) {
    %c0_i32 = arith.constant 0 : i32
    %c0_i32_0 = arith.constant 0 : i32
    return %arg0, %c0_i32 : i32, i32
  }
}

</mosaic_0001>

<llo_original>
// kernel: tpu_custom_call.1
$region0: #{tpu_custom_call.1}
  #allocation0 [shape = 'u32[]', space=smem, size = 0x4, offset = 0x4, fixed_abs, tag = 'smem constant byte address 0x4 - core index']
  #allocation1 [shape = 'u32[144,128]{1,0:T(1,128)}', space=vmem, size = 0x12000, scoped, tag = 'internal scratch']
  #allocation2 [shape = 'f32[1,1]{1,0:T(1,128)S(1)}', space=vmem, size = 0x200, scoped, tag = 'scoped memory for tpu_custom_call.1']
  %s0 = inlined_call_operand.vmem [shape: f32[8,32], index: 0, kind: input, shape index: {}]
  %s1 = inlined_call_operand.vmem [shape: f32[32,10], index: 1, kind: input, shape index: {}]
  %s2 = inlined_call_operand.vmem [shape: f32[1,10], index: 2, kind: input, shape index: {}]
  %s3 = inlined_call_operand.vmem [shape: f32[10,1], index: 3, kind: input, shape index: {}]
  %s4 = inlined_call_operand.<no memory space> [shape: f32[1,1], index: 4, kind: input, shape index: {}]
  %s5 = inlined_call_operand.hbm [shape: f32[1,8], index: 5, kind: output, shape index: {}]
  %s6 = sld [smem:[#allocation0]]
  $region30: #{tpu_custom_call.1} parent=0
    _
  %s8 = ssub.s32 1, %s6
  %s9 = scalar_select 0, %s8, %s6
  %v10 = vstv %s4
  %11 = vst [vmem:[#allocation2] sm:$0x1] %v10
  $region1: #{tpu_custom_call.1} parent=0
    #allocation3 [shape = 'u8[512]{0}', space=vmem, size = 0x400, scoped, tag = 'output window, operand 0, single buffered']
    #allocation4 [shape = 's32[1]{0}', space=sflag, size = 0x4, scoped, tag = 'scoped memory for tpu_custom_call.1']
    %12 = vsyncpa [#allocation4], 0
    // Predicated region
    $region2: #{tpu_custom_call.1} parent=1 // pred_check
      _
    $region3: #{tpu_custom_call.1} parent=1 // pred_check_branch
      %14 = sbr.rel (0) target = $region5
    $region4: #{tpu_custom_call.1} parent=1 // pred_region
      _
    $region5: #{tpu_custom_call.1} parent=1 // pred_fallthru
      _
    // Predicated region
    $region6: #{tpu_custom_call.1} parent=1 // pred_check
      _
    $region7: #{tpu_custom_call.1} parent=1 // pred_check_branch
      %16 = sbr.rel (0) target = $region9
    $region8: #{tpu_custom_call.1} parent=1 // pred_region
      _
    $region9: #{tpu_custom_call.1} parent=1 // pred_fallthru
      _
    // Predicated region
    $region10: #{tpu_custom_call.1} parent=1 // pred_check
      _
    $region11: #{tpu_custom_call.1} parent=1 // pred_check_branch
      %18 = sbr.rel (0) target = $region13
    $region12: #{tpu_custom_call.1} parent=1 // pred_region
      _
    $region13: #{tpu_custom_call.1} parent=1 // pred_fallthru
      _
    // Predicated region
    $region14: #{tpu_custom_call.1} parent=1 // pred_check
      _
    $region15: #{tpu_custom_call.1} parent=1 // pred_check_branch
      %20 = sbr.rel (0) target = $region17
    $region16: #{tpu_custom_call.1} parent=1 // pred_region
      _
    $region17: #{tpu_custom_call.1} parent=1 // pred_fallthru
      _
    // Predicated region
    $region18: #{tpu_custom_call.1} parent=1 // pred_check
      _
    $region19: #{tpu_custom_call.1} parent=1 // pred_check_branch
      %22 = sbr.rel (0) target = $region21
    $region20: #{tpu_custom_call.1} parent=1 // pred_region
      _
    $region21: #{tpu_custom_call.1} parent=1 // pred_fallthru
      _
    %v23 = vld [vmem:[%s0] sm:$0xff]
    %v24 = vld [vmem:[%s1] sm:$0xff]
    %v25 = vld [vmem:[%s1 + $0x8] sm:$0xff]
    %v26 = vld [vmem:[%s1 + $0x10] sm:$0xff]
    %v27 = vld [vmem:[%s1 + $0x18] sm:$0xff]
    %v28 = vld [vmem:[%s2] sm:$0x1]
    %v30 = vlaneseq
    %v31 = vshrl.u32 %v30, 7
    %v32 = vsub.s32 0, %v31
    %v33 = vrot.slane %v28, %v32
    %vm35 = vcmask 261120
    %v37 = vsel %vm35, %v23, 0
    %39 = vmatprep.subr.mxu0 0.0
    %40 = vmatpush1.msra.mxu0 0.0
    %41 = vmatprep.subr.mxu0 0.0
    %42 = vmatpush1.msra.mxu0 0.0
    %43 = vmatprep.subr.mxu0 0.0
    %44 = vmatpush1.msra.mxu0 0.0
    %45 = vmatprep.subr.mxu0 0.0
    %46 = vmatpush1.msra.mxu0 0.0
    %47 = vmatprep.subr.mxu0 0.0
    %48 = vmatpush1.msra.mxu0 0.0
    %49 = vmatprep.subr.mxu0 0.0
    %50 = vmatpush1.msra.mxu0 0.0
    %51 = vmatprep.subr.mxu0 0.0
    %52 = vmatpush1.msra.mxu0 0.0
    %53 = vmatprep.subr.mxu0 0.0
    %54 = vmatpush1.msra.mxu0 0.0
    %55 = vmatprep.subr.mxu0 0.0
    %56 = vmatpush1.msra.mxu0 0.0
    %57 = vmatprep.subr.mxu0 0.0
    %58 = vmatpush1.msra.mxu0 0.0
    %59 = vmatprep.subr.mxu0 0.0
    %60 = vmatpush1.msra.mxu0 0.0
    %61 = vmatprep.subr.mxu0 0.0
    %62 = vmatpush1.msra.mxu0 0.0
    %63 = vmatprep.subr.mxu0 0.0
    %64 = vmatpush1.msra.mxu0 %v27
    %65 = vmatprep.subr.mxu0 0.0
    %66 = vmatpush1.msra.mxu0 %v26
    %67 = vmatprep.subr.mxu0 0.0
    %68 = vmatpush1.msra.mxu0 %v25
    %69 = vmatprep.subr.mxu0 0.0
    %70 = vmatpush1.msra.mxu0 %v24
    %71 = vmatprep.subr.mxu0 0.0
    %72 = vmatpush2.msra.mxu0 0.0
    %73 = vmatprep.subr.mxu0 0.0
    %74 = vmatpush2.msra.mxu0 0.0
    %75 = vmatprep.subr.mxu0 0.0
    %76 = vmatpush2.msra.mxu0 0.0
    %77 = vmatprep.subr.mxu0 0.0
    %78 = vmatpush2.msra.mxu0 0.0
    %79 = vmatprep.subr.mxu0 0.0
    %80 = vmatpush2.msra.mxu0 0.0
    %81 = vmatprep.subr.mxu0 0.0
    %82 = vmatpush2.msra.mxu0 0.0
    %83 = vmatprep.subr.mxu0 0.0
    %84 = vmatpush2.msra.mxu0 0.0
    %85 = vmatprep.subr.mxu0 0.0
    %86 = vmatpush2.msra.mxu0 0.0
    %87 = vmatprep.subr.mxu0 0.0
    %88 = vmatpush2.msra.mxu0 0.0
    %89 = vmatprep.subr.mxu0 0.0
    %90 = vmatpush2.msra.mxu0 0.0
    %91 = vmatprep.subr.mxu0 0.0
    %92 = vmatpush2.msra.mxu0 0.0
    %93 = vmatprep.subr.mxu0 0.0
    %94 = vmatpush2.msra.mxu0 0.0
    %95 = vmatprep.subr.mxu0 0.0
    %96 = vmatpush2.msra.mxu0 0.0
    %97 = vmatprep.subr.mxu0 0.0
    %98 = vmatpush2.msra.mxu0 0.0
    %99 = vmatprep.subr.mxu0 0.0
    %100 = vmatpush2.msra.mxu0 0.0
    %101 = vmatprep.subr.mxu0 0.0
    %102 = vmatpush2.msra.mxu0 0.0
    %103 = vmatprep.mubr.f32.mxu0 0.0
    %104 = vmatmul.mubr.f32.gmra.mxu0 %v37
    %v105 = vpop.f32.mrf.mxu0
    %v106 = vadd.f32 %v33, %v105
    %v107 = vpop.f32.mrf.mxu0
    %108 = vdwg.mxu0
    %v109 = vxor.u32 %v106, 2147483648
    %v110 = vmul.f32 %v109, 1.442695
    %v111 = vpow.pop %v110
    %v112 = vadd.f32 %v111, 1.0
    %v113 = vrcp.pop %v112
    %v114 = vmul.f32 1.0, %v113
    %v115 = vld [vmem:[%s3] sm:$0xff]
    %v116 = vld [vmem:[%s3 + $0x8] sm:$0x3]
    %v117 = vld [vmem:[#allocation2] sm:$0x1]
    %v119 = vlaneseq
    %v120 = vshrl.u32 %v119, 7
    %v121 = vsub.s32 0, %v120
    %v122 = vrot.slane %v117, %v121
    %vm124 = vcmask 80896
    %v126 = vsel %vm124, %v114, 0
    %vm128 = vcmask 1041408
    %v130 = vsel %vm128, %v116, 0
    %132 = vmatprep.subr.mxu0 0.0
    %133 = vmatpush1.msra.mxu0 0.0
    %134 = vmatprep.subr.mxu0 0.0
    %135 = vmatpush1.msra.mxu0 0.0
    %136 = vmatprep.subr.mxu0 0.0
    %137 = vmatpush1.msra.mxu0 0.0
    %138 = vmatprep.subr.mxu0 0.0
    %139 = vmatpush1.msra.mxu0 0.0
    %140 = vmatprep.subr.mxu0 0.0
    %141 = vmatpush1.msra.mxu0 0.0
    %142 = vmatprep.subr.mxu0 0.0
    %143 = vmatpush1.msra.mxu0 0.0
    %144 = vmatprep.subr.mxu0 0.0
    %145 = vmatpush1.msra.mxu0 0.0
    %146 = vmatprep.subr.mxu0 0.0
    %147 = vmatpush1.msra.mxu0 0.0
    %148 = vmatprep.subr.mxu0 0.0
    %149 = vmatpush1.msra.mxu0 0.0
    %150 = vmatprep.subr.mxu0 0.0
    %151 = vmatpush1.msra.mxu0 0.0
    %152 = vmatprep.subr.mxu0 0.0
    %153 = vmatpush1.msra.mxu0 0.0
    %154 = vmatprep.subr.mxu0 0.0
    %155 = vmatpush1.msra.mxu0 0.0
    %156 = vmatprep.subr.mxu0 0.0
    %157 = vmatpush1.msra.mxu0 0.0
    %158 = vmatprep.subr.mxu0 0.0
    %159 = vmatpush1.msra.mxu0 0.0
    %160 = vmatprep.subr.mxu0 0.0
    %161 = vmatpush1.msra.mxu0 %v130
    %162 = vmatprep.subr.mxu0 0.0
    %163 = vmatpush1.msra.mxu0 %v115
    %164 = vmatprep.subr.mxu0 0.0
    %165 = vmatpush2.msra.mxu0 0.0
    %166 = vmatprep.subr.mxu0 0.0
    %167 = vmatpush2.msra.mxu0 0.0
    %168 = vmatprep.subr.mxu0 0.0
    %169 = vmatpush2.msra.mxu0 0.0
    %170 = vmatprep.subr.mxu0 0.0
    %171 = vmatpush2.msra.mxu0 0.0
    %172 = vmatprep.subr.mxu0 0.0
    %173 = vmatpush2.msra.mxu0 0.0
    %174 = vmatprep.subr.mxu0 0.0
    %175 = vmatpush2.msra.mxu0 0.0
    %176 = vmatprep.subr.mxu0 0.0
    %177 = vmatpush2.msra.mxu0 0.0
    %178 = vmatprep.subr.mxu0 0.0
    %179 = vmatpush2.msra.mxu0 0.0
    %180 = vmatprep.subr.mxu0 0.0
    %181 = vmatpush2.msra.mxu0 0.0
    %182 = vmatprep.subr.mxu0 0.0
    %183 = vmatpush2.msra.mxu0 0.0
    %184 = vmatprep.subr.mxu0 0.0
    %185 = vmatpush2.msra.mxu0 0.0
    %186 = vmatprep.subr.mxu0 0.0
    %187 = vmatpush2.msra.mxu0 0.0
    %188 = vmatprep.subr.mxu0 0.0
    %189 = vmatpush2.msra.mxu0 0.0
    %190 = vmatprep.subr.mxu0 0.0
    %191 = vmatpush2.msra.mxu0 0.0
    %192 = vmatprep.subr.mxu0 0.0
    %193 = vmatpush2.msra.mxu0 0.0
    %194 = vmatprep.subr.mxu0 0.0
    %195 = vmatpush2.msra.mxu0 0.0
    %196 = vmatprep.mubr.f32.mxu0 0.0
    %197 = vmatmul.mubr.f32.gmra.mxu0 %v126
    %v198 = vpop.f32.mrf.mxu0
    %v199 = vadd.f32 %v122, %v198
    %v200 = vpop.f32.mrf.mxu0
    %201 = vdwg.mxu0
    %203 = vset.pattern.permute.xlu0 0
    %204 = vperm.xlu0 %203, %v199
    %v205 = vpop.permute.xlu0 %204
    %v206 = vlaneseq
    %v207 = vand.u32 %v206, 127
    %v208 = vlaneseq
    %v209 = vshrl.u32 %v208, 7
    %v210 = vsub.s32 %v207, %v209
    %v211 = vrot.slane %v205, %v210
    %vm213 = vcmask 57344
    %214 = vst.msk [vmem:[#allocation3] sm:$0x1] %vm213, %v211
    // Predicated region
    $region22: #{tpu_custom_call.1} parent=1 // pred_check
      _
    $region23: #{tpu_custom_call.1} parent=1 // pred_check_branch
      %216 = sbr.rel (0) target = $region25
    $region24: #{tpu_custom_call.1} parent=1 // pred_region
      %s218 = ssub.s32 16, 16
      %219 = vsyncadd [#allocation4], %s218
      %s221 = sshll.u32 [#allocation3], 4
      %s222 = int_to_ptr.vmem [resolvable:$true] %s221
      %224 = dma.vmem_to_hbm [thread:$0]  %s222, 16, %s5, [#allocation4]
    $region25: #{tpu_custom_call.1} parent=1 // pred_fallthru
      _
    // Predicated region
    $region26: #{tpu_custom_call.1} parent=1 // pred_check
      _
    $region27: #{tpu_custom_call.1} parent=1 // pred_check_branch
      %226 = sbr.rel (0) target = $region29
    $region28: #{tpu_custom_call.1} parent=1 // pred_region
      %227 = dma.done [#allocation4], 16
    $region29: #{tpu_custom_call.1} parent=1 // pred_fallthru
      _
    %228 = vsyncpa [#allocation4], 1

</llo_original>
